<compile_context>
chip_gen: v6e
topology: v6e:2x2x1
jax: 0.10.0
libtpu: 0.0.40
codegen_flags: <defaults>
</compile_context>

<pallas_src>
import functools
import math

import jax
import jax.numpy as jnp
from jax.experimental import pallas as pl
from jax.experimental.pallas import tpu as pltpu

LANE = 128
SUBLANE = 8
_VMEM_LIMIT_BYTES = 48 * 1024 * 1024        # safe on v5e/v6e (128 MiB) and v7x (64 MiB)
_MAX_X_TILE_BYTES = 8 * 1024 * 1024         # cap for the (double-buffered) x tile


def _round_up(n, m):
    return ((n + m - 1) // m) * m


def _pad_to(a, shape):
    pads = [(0, t - s) for s, t in zip(a.shape, shape)]
    if all(p == (0, 0) for p in pads):
        return a
    return jnp.pad(a, pads)


# ----------------------------------------------------------------------------
# Kernels
# ----------------------------------------------------------------------------
def _encoder_fused_kernel(x_ref, w1_ref, b1_ref, w2_ref, b2_ref, w3_ref, b3_ref,
                          out_ref, *, inv_b):
    """Single-invocation path: whole x tile in VMEM, mean folded through fc3."""
    x = x_ref[...]
    h1 = jnp.maximum(
        jnp.dot(x, w1_ref[...], preferred_element_type=jnp.float32) + b1_ref[...], 0.0)
    h2 = jnp.maximum(
        jnp.dot(h1, w2_ref[...], preferred_element_type=jnp.float32) + b2_ref[...], 0.0)
    # mean(h2 @ w3 + b3, axis=0) == (mean(h2, axis=0) @ w3) + b3
    s = jnp.sum(h2, axis=0, keepdims=True) * inv_b                     # [1, d2]
    out_ref[...] = (
        jnp.dot(s, w3_ref[...], preferred_element_type=jnp.float32) + b3_ref[...])


def _encoder_tiled_kernel(x_ref, w1_ref, b1_ref, w2_ref, b2_ref, w3_ref, b3_ref,
                          out_ref, acc_ref, *, inv_b, n_pad):
    """Batch-tiled path: accumulate column-sum of h2; finalize with tiny matmul.

    Batch-padding rows (zero x rows appended to fill the last tile) are NOT
    masked per step; their exact contribution is subtracted once at finalize.
    """
    i = pl.program_id(0)

    @pl.when(i == 0)
    def _init():
        acc_ref[...] = jnp.zeros_like(acc_ref)

    x = x_ref[...]
    h1 = jnp.maximum(
        jnp.dot(x, w1_ref[...], preferred_element_type=jnp.float32) + b1_ref[...], 0.0)
    h2 = jnp.maximum(
        jnp.dot(h1, w2_ref[...], preferred_element_type=jnp.float32) + b2_ref[...], 0.0)

    # Column-sum on the XLU (different slot than the MXU matmuls -> cheap).
    acc_ref[...] += jnp.sum(h2, axis=0, keepdims=True)                 # [1, d2]

    @pl.when(i == pl.num_programs(0) - 1)
    def _finalize():
        s = acc_ref[...]
        if n_pad:  # static: a zero x row yields h2_pad = relu(relu(b1) @ w2 + b2)
            h1_pad = jnp.maximum(b1_ref[...], 0.0)
            h2_pad = jnp.maximum(
                jnp.dot(h1_pad, w2_ref[...], preferred_element_type=jnp.float32)
                + b2_ref[...], 0.0)
            s = s - float(n_pad) * h2_pad
        s = s * inv_b
        out_ref[...] = (
            jnp.dot(s, w3_ref[...], preferred_element_type=jnp.float32) + b3_ref[...])


# ----------------------------------------------------------------------------
# Wrapper
# ----------------------------------------------------------------------------
def encoder_forward(x, params, *, tile_b=256, fused_batch_threshold=1024):
    """x: [B, emb_dim] f32 -> [1, hid_dim] f32 (mean over batch, keepdim)."""
    w1, b1, w2, b2, w3, b3 = params
    b_total, d0 = x.shape
    d1, d2, d3 = w1.shape[1], w2.shape[1], w3.shape[1]

    # Lane-dense padding of all feature dims (zeros are inert for Linear+ReLU).
    d0p, d1p, d2p, d3p = (_round_up(d, LANE) for d in (d0, d1, d2, d3))
    xp = _pad_to(x, (b_total, d0p))
    w1p, b1p = _pad_to(w1, (d0p, d1p)), _pad_to(b1, (1, d1p))
    w2p, b2p = _pad_to(w2, (d1p, d2p)), _pad_to(b2, (1, d2p))
    w3p, b3p = _pad_to(w3, (d2p, d3p)), _pad_to(b3, (1, d3p))

    inv_b = 1.0 / float(b_total)

    if b_total <= fused_batch_threshold:
        # Fast path: no grid, no per-step overhead (right choice for toy shapes).
        vmem = pl.BlockSpec(memory_space=pltpu.MemorySpace.VMEM)
        out = pl.pallas_call(
            functools.partial(_encoder_fused_kernel, inv_b=inv_b),
            out_shape=jax.ShapeDtypeStruct((1, d3p), jnp.float32),
            in_specs=[vmem] * 7,
            out_specs=vmem,
            compiler_params=pltpu.CompilerParams(
                vmem_limit_bytes=_VMEM_LIMIT_BYTES),
        )(xp, w1p, b1p, w2p, b2p, w3p, b3p)
        return out[:, :d3]

    # Tiled path: stream x over a batch grid, keep weights resident, accumulate.
    tile_b = max(SUBLANE, _round_up(min(tile_b, b_total), SUBLANE))
    # Keep the double-buffered x tile within budget (v7x has only 64 MiB VMEM).
    while tile_b > SUBLANE and 2 * tile_b * d0p * 4 > _MAX_X_TILE_BYTES:
        tile_b = _round_up(tile_b // 2, SUBLANE)
    b_pad = _round_up(b_total, tile_b)
    n_pad = b_pad - b_total
    if n_pad:
        xp = jnp.pad(xp, ((0, n_pad), (0, 0)))
    n_steps = b_pad // tile_b

    grid_spec = pltpu.PrefetchScalarGridSpec(
        num_scalar_prefetch=0,
        grid=(n_steps,),
        in_specs=[
            pl.BlockSpec((tile_b, d0p), lambda i: (i, 0)),   # streamed x tile
            pl.BlockSpec((d0p, d1p), lambda i: (0, 0)),      # resident weights
            pl.BlockSpec((1, d1p), lambda i: (0, 0)),
            pl.BlockSpec((d1p, d2p), lambda i: (0, 0)),
            pl.BlockSpec((1, d2p), lambda i: (0, 0)),
            pl.BlockSpec((d2p, d3p), lambda i: (0, 0)),
            pl.BlockSpec((1, d3p), lambda i: (0, 0)),
        ],
        out_specs=pl.BlockSpec((1, d3p), lambda i: (0, 0)),
        scratch_shapes=[pltpu.VMEM((1, d2p), jnp.float32)],  # sum-of-h2 accumulator
    )
    # TODO(synk): on v7x, split the batch grid across the 2 TensorCores
    # (parallel leading axis + (2, d2) partial sums combined in the wrapper).
    flops = 2 * b_pad * (d0p * d1p + d1p * d2p) + 2 * d2p * d3p
    bytes_accessed = 4 * (b_pad * d0p + d0p * d1p + d1p * d2p + d2p * d3p
                          + d1p + d2p + d3p + d3p)
    out = pl.pallas_call(
        functools.partial(_encoder_tiled_kernel, inv_b=inv_b, n_pad=n_pad),
        out_shape=jax.ShapeDtypeStruct((1, d3p), jnp.float32),
        grid_spec=grid_spec,
        compiler_params=pltpu.CompilerParams(
            dimension_semantics=("arbitrary",),          # reduction over batch tiles
            vmem_limit_bytes=_VMEM_LIMIT_BYTES),
        cost_estimate=pl.CostEstimate(flops=flops, transcendentals=0,
                                      bytes_accessed=bytes_accessed),
    )(xp, w1p, b1p, w2p, b2p, w3p, b3p)
    return out[:, :d3]


# ----------------------------------------------------------------------------
# Params / reference
# ----------------------------------------------------------------------------
def init_encoder_params(key, emb_dim, hid_dim):
    """Deterministic init mirroring nn.Linear's default U(-1/sqrt(fan_in), +...)."""
    mid_rate = (hid_dim / emb_dim) ** (1.0 / 3.0)
    d0 = emb_dim
    d1 = round(emb_dim * mid_rate)
    d2 = round(emb_dim * mid_rate ** 2)
    d3 = round(hid_dim)

    params = []
    for (fan_in, fan_out) in [(d0, d1), (d1, d2), (d2, d3)]:
        key, kw, kb = jax.random.split(key, 3)
        bound = 1.0 / math.sqrt(fan_in)
        w = jax.random.uniform(kw, (fan_in, fan_out), jnp.float32, -bound, bound)
        b = jax.random.uniform(kb, (1, fan_out), jnp.float32, -bound, bound)
        params.extend([w, b])
    return tuple(params)


def encoder_reference(x, params):
    """Pure-JAX reference of the same forward pass."""
    w1, b1, w2, b2, w3, b3 = params
    h1 = jnp.maximum(x @ w1 + b1, 0.0)
    h2 = jnp.maximum(h1 @ w2 + b2, 0.0)
    h3 = h2 @ w3 + b3
    return jnp.mean(h3, axis=0, keepdims=True)


if __name__ == "__main__":
    # Shapes consistent with the module: emb_dim=16, hid_dim=128
    # -> mid_rate = 2, layer dims 16 -> 32 -> 64 -> 128; batch=8.
    emb_dim, hid_dim, batch = 16, 128, 8

    key = jax.random.PRNGKey(0)
    key, kx = jax.random.split(key)
    x = jax.random.normal(kx, (batch, emb_dim), jnp.float32)
    params = init_encoder_params(key, emb_dim, hid_dim)

    # Fused fast path (toy batch).
    z = encoder_forward(x, params)
    jax.block_until_ready(z)
    z_ref = encoder_reference(x, params)
    assert z.shape == (1, hid_dim)
    assert jnp.allclose(z, z_ref, atol=1e-4, rtol=1e-4)

    # Also exercise the tiled/accumulator path (batch not a multiple of the tile
    # exercises the padded-row correction at finalize).
    key, kx2 = jax.random.split(key)
    big_batch = 60
    x_big = jax.random.normal(kx2, (big_batch, emb_dim), jnp.float32)
    z_big = encoder_forward(x_big, params, tile_b=16, fused_batch_threshold=0)
    jax.block_until_ready(z_big)
    z_big_ref = encoder_reference(x_big, params)
    assert z_big.shape == (1, hid_dim)
    assert jnp.allclose(z_big, z_big_ref, atol=1e-4, rtol=1e-4)

    print("KERNEL_OK")
</pallas_src>

<mosaic_0001>
module attributes {stable_mosaic.version = 11 : i64} {
  func.func @_encoder_fused_kernel(%arg0: memref<8x128xf32, #tpu.memory_space<vmem>>, %arg1: memref<128x128xf32, #tpu.memory_space<vmem>>, %arg2: memref<1x128xf32, #tpu.memory_space<vmem>>, %arg3: memref<128x128xf32, #tpu.memory_space<vmem>>, %arg4: memref<1x128xf32, #tpu.memory_space<vmem>>, %arg5: memref<128x128xf32, #tpu.memory_space<vmem>>, %arg6: memref<1x128xf32, #tpu.memory_space<vmem>>, %arg7: memref<1x128xf32, #tpu.memory_space<vmem>>) attributes {dimension_semantics = [], scalar_prefetch = 0 : i64, scratch_operands = 0 : i64, tpu.core_type = #tpu.core_type<tc>} {
    %c0 = arith.constant 0 : index
    %c0_0 = arith.constant 0 : index
    %0 = vector.load %arg0[%c0, %c0_0] : memref<8x128xf32, #tpu.memory_space<vmem>>, vector<8x128xf32>
    %c0_1 = arith.constant 0 : index
    %c0_2 = arith.constant 0 : index
    %1 = vector.load %arg1[%c0_1, %c0_2] : memref<128x128xf32, #tpu.memory_space<vmem>>, vector<128x128xf32>
    %cst = arith.constant dense<0.000000e+00> : vector<8x128xf32>
    %2 = tpu.matmul %0, %1, %cst {dimension_numbers = #tpu.dot_dimension_numbers<[1], [0], [0], [1], [0, 0, 1, 1], [], []>} : vector<8x128xf32>, vector<128x128xf32>, vector<8x128xf32> -> vector<8x128xf32>
    %c0_3 = arith.constant 0 : index
    %c0_4 = arith.constant 0 : index
    %3 = vector.load %arg2[%c0_3, %c0_4] : memref<1x128xf32, #tpu.memory_space<vmem>>, vector<1x128xf32>
    %4 = vector.broadcast %3 : vector<1x128xf32> to vector<8x128xf32>
    %5 = arith.addf %2, %4 : vector<8x128xf32>
    %cst_5 = arith.constant 0.000000e+00 : f32
    %6 = vector.broadcast %cst_5 : f32 to vector<8x128xf32>
    %7 = arith.maximumf %5, %6 : vector<8x128xf32>
    %c0_6 = arith.constant 0 : index
    %c0_7 = arith.constant 0 : index
    %8 = vector.load %arg3[%c0_6, %c0_7] : memref<128x128xf32, #tpu.memory_space<vmem>>, vector<128x128xf32>
    %cst_8 = arith.constant dense<0.000000e+00> : vector<8x128xf32>
    %9 = tpu.matmul %7, %8, %cst_8 {dimension_numbers = #tpu.dot_dimension_numbers<[1], [0], [0], [1], [0, 0, 1, 1], [], []>} : vector<8x128xf32>, vector<128x128xf32>, vector<8x128xf32> -> vector<8x128xf32>
    %c0_9 = arith.constant 0 : index
    %c0_10 = arith.constant 0 : index
    %10 = vector.load %arg4[%c0_9, %c0_10] : memref<1x128xf32, #tpu.memory_space<vmem>>, vector<1x128xf32>
    %11 = vector.broadcast %10 : vector<1x128xf32> to vector<8x128xf32>
    %12 = arith.addf %9, %11 : vector<8x128xf32>
    %cst_11 = arith.constant 0.000000e+00 : f32
    %13 = vector.broadcast %cst_11 : f32 to vector<8x128xf32>
    %14 = arith.maximumf %12, %13 : vector<8x128xf32>
    %cst_12 = arith.constant dense<0.000000e+00> : vector<128xf32>
    %15 = vector.multi_reduction <add>, %14, %cst_12 [0] : vector<8x128xf32> to vector<128xf32>
    %16 = vector.shape_cast %15 : vector<128xf32> to vector<1x128xf32>
    %cst_13 = arith.constant 1.250000e-01 : f32
    %17 = vector.broadcast %cst_13 : f32 to vector<1x128xf32>
    %18 = arith.mulf %16, %17 : vector<1x128xf32>
    %c0_14 = arith.constant 0 : index
    %c0_15 = arith.constant 0 : index
    %19 = vector.load %arg5[%c0_14, %c0_15] : memref<128x128xf32, #tpu.memory_space<vmem>>, vector<128x128xf32>
    %cst_16 = arith.constant dense<0.000000e+00> : vector<1x128xf32>
    %20 = tpu.matmul %18, %19, %cst_16 {dimension_numbers = #tpu.dot_dimension_numbers<[1], [0], [0], [1], [0, 0, 1, 1], [], []>} : vector<1x128xf32>, vector<128x128xf32>, vector<1x128xf32> -> vector<1x128xf32>
    %c0_17 = arith.constant 0 : index
    %c0_18 = arith.constant 0 : index
    %21 = vector.load %arg6[%c0_17, %c0_18] : memref<1x128xf32, #tpu.memory_space<vmem>>, vector<1x128xf32>
    %22 = arith.addf %20, %21 : vector<1x128xf32>
    %c0_19 = arith.constant 0 : index
    %c0_20 = arith.constant 0 : index
    %23 = vector.load %arg7[%c0_19, %c0_20] : memref<1x128xf32, #tpu.memory_space<vmem>>, vector<1x128xf32>
    tpu.vector_store %arg7[%c0_19, %c0_20], %22 {strides = array<i32>} : memref<1x128xf32, #tpu.memory_space<vmem>>, vector<1x128xf32>,
    return
  }
}

</mosaic_0001>

<llo_original>
// kernel: tpu_custom_call.1
$region0: #{tpu_custom_call.1}
  #allocation0 [shape = 'u32[]', space=smem, size = 0x4, offset = 0x4, fixed_abs, tag = 'smem constant byte address 0x4 - core index']
  #allocation1 [shape = 'u32[144,128]{1,0:T(1,128)}', space=vmem, size = 0x12000, scoped, tag = 'internal scratch']
  %s0 = inlined_call_operand.hbm [shape: f32[8,128], index: 0, kind: input, shape index: {}]
  %s1 = inlined_call_operand.hbm [shape: f32[128,128], index: 1, kind: input, shape index: {}]
  %s2 = inlined_call_operand.vmem [shape: f32[1,128], index: 2, kind: input, shape index: {}]
  %s3 = inlined_call_operand.hbm [shape: f32[128,128], index: 3, kind: input, shape index: {}]
  %s4 = inlined_call_operand.vmem [shape: f32[1,128], index: 4, kind: input, shape index: {}]
  %s5 = inlined_call_operand.hbm [shape: f32[128,128], index: 5, kind: input, shape index: {}]
  %s6 = inlined_call_operand.vmem [shape: f32[1,128], index: 6, kind: input, shape index: {}]
  %s7 = inlined_call_operand.hbm [shape: f32[1,128], index: 7, kind: output, shape index: {}]
  %s8 = sld [smem:[#allocation0]]
  $region54: #{tpu_custom_call.1} parent=0
    _
  %s10 = ssub.s32 1, %s8
  %s11 = scalar_select 0, %s10, %s8
  $region1: #{tpu_custom_call.1} parent=0
    #allocation2 [shape = 'u8[4096]{0}', space=vmem, size = 0x1000, scoped, tag = 'input window, operand 0, single buffered']
    #allocation3 [shape = 's32[1]{0}', space=sflag, size = 0x4, scoped, tag = 'scoped memory for tpu_custom_call.1']
    #allocation4 [shape = 's32[1]{0}', space=sflag, size = 0x4, scoped, tag = 'scoped memory for tpu_custom_call.1']
    #allocation5 [shape = 'u8[65536]{0}', space=vmem, size = 0x10000, scoped, tag = 'input window, operand 1, single buffered']
    #allocation6 [shape = 's32[1]{0}', space=sflag, size = 0x4, scoped, tag = 'scoped memory for tpu_custom_call.1']
    #allocation7 [shape = 'u8[65536]{0}', space=vmem, size = 0x10000, scoped, tag = 'input window, operand 3, single buffered']
    #allocation8 [shape = 'u8[65536]{0}', space=vmem, size = 0x10000, scoped, tag = 'input window, operand 5, single buffered']
    #allocation9 [shape = 's32[1]{0}', space=sflag, size = 0x4, scoped, tag = 'scoped memory for tpu_custom_call.1']
    #allocation10 [shape = 'u8[512]{0}', space=vmem, size = 0x400, scoped, tag = 'output window, operand 0, single buffered']
    %12 = vsyncpa [#allocation3], 0
    %13 = vsyncpa [#allocation6], 0
    %14 = vsyncpa [#allocation9], 0
    %15 = vsyncpa [#allocation4], 0
    // Predicated region
    $region2: #{tpu_custom_call.1} parent=1 // pred_check
      _
    $region3: #{tpu_custom_call.1} parent=1 // pred_check_branch
      %17 = sbr.rel (0) target = $region5
    $region4: #{tpu_custom_call.1} parent=1 // pred_region
      %s19 = ssub.s32 128, 128
      %20 = vsyncadd [#allocation3], %s19
      %s22 = sshll.u32 [#allocation2], 4
      %s23 = int_to_ptr.vmem [resolvable:$true] %s22
      %25 = dma.hbm_to_vmem [thread:$0]  %s0, 128, %s23, [#allocation3]
    $region5: #{tpu_custom_call.1} parent=1 // pred_fallthru
      _
    // Predicated region
    $region6: #{tpu_custom_call.1} parent=1 // pred_check
      _
    $region7: #{tpu_custom_call.1} parent=1 // pred_check_branch
      %27 = sbr.rel (0) target = $region9
    $region8: #{tpu_custom_call.1} parent=1 // pred_region
      %s29 = ssub.s32 2048, 2048
      %30 = vsyncadd [#allocation6], %s29
      %s31 = sshll.u32 [#allocation5], 4
      %s32 = int_to_ptr.vmem [resolvable:$true] %s31
      %37 = dma.hbm_to_vmem [thread:$0]  %s1, 2048, %s32, [#allocation6], 128, 128, 8
    $region9: #{tpu_custom_call.1} parent=1 // pred_fallthru
      _
    // Predicated region
    $region10: #{tpu_custom_call.1} parent=1 // pred_check
      _
    $region11: #{tpu_custom_call.1} parent=1 // pred_check_branch
      %39 = sbr.rel (0) target = $region13
    $region12: #{tpu_custom_call.1} parent=1 // pred_region
      _
    $region13: #{tpu_custom_call.1} parent=1 // pred_fallthru
      _
    // Predicated region
    $region14: #{tpu_custom_call.1} parent=1 // pred_check
      _
    $region15: #{tpu_custom_call.1} parent=1 // pred_check_branch
      %41 = sbr.rel (0) target = $region17
    $region16: #{tpu_custom_call.1} parent=1 // pred_region
      %s43 = ssub.s32 2048, 2048
      %44 = vsyncadd [#allocation6], %s43
      %s45 = sshll.u32 [#allocation7], 4
      %s46 = int_to_ptr.vmem [resolvable:$true] %s45
      %51 = dma.hbm_to_vmem [thread:$0]  %s3, 2048, %s46, [#allocation6], 128, 128, 8
    $region17: #{tpu_custom_call.1} parent=1 // pred_fallthru
      _
    // Predicated region
    $region18: #{tpu_custom_call.1} parent=1 // pred_check
      _
    $region19: #{tpu_custom_call.1} parent=1 // pred_check_branch
      %53 = sbr.rel (0) target = $region21
    $region20: #{tpu_custom_call.1} parent=1 // pred_region
      _
    $region21: #{tpu_custom_call.1} parent=1 // pred_fallthru
      _
    // Predicated region
    $region22: #{tpu_custom_call.1} parent=1 // pred_check
      _
    $region23: #{tpu_custom_call.1} parent=1 // pred_check_branch
      %55 = sbr.rel (0) target = $region25
    $region24: #{tpu_custom_call.1} parent=1 // pred_region
      %s57 = ssub.s32 2048, 2048
      %58 = vsyncadd [#allocation9], %s57
      %s59 = sshll.u32 [#allocation8], 4
      %s60 = int_to_ptr.vmem [resolvable:$true] %s59
      %65 = dma.hbm_to_vmem [thread:$0]  %s5, 2048, %s60, [#allocation9], 128, 128, 8
    $region25: #{tpu_custom_call.1} parent=1 // pred_fallthru
      _
    // Predicated region
    $region26: #{tpu_custom_call.1} parent=1 // pred_check
      _
    $region27: #{tpu_custom_call.1} parent=1 // pred_check_branch
      %67 = sbr.rel (0) target = $region29
    $region28: #{tpu_custom_call.1} parent=1 // pred_region
      _
    $region29: #{tpu_custom_call.1} parent=1 // pred_fallthru
      _
    // Predicated region
    $region30: #{tpu_custom_call.1} parent=1 // pred_check
      _
    $region31: #{tpu_custom_call.1} parent=1 // pred_check_branch
      %69 = sbr.rel (0) target = $region33
    $region32: #{tpu_custom_call.1} parent=1 // pred_region
      %70 = dma.done [#allocation3], 128
    $region33: #{tpu_custom_call.1} parent=1 // pred_fallthru
      _
    // Predicated region
    $region34: #{tpu_custom_call.1} parent=1 // pred_check
      _
    $region35: #{tpu_custom_call.1} parent=1 // pred_check_branch
      %72 = sbr.rel (0) target = $region37
    $region36: #{tpu_custom_call.1} parent=1 // pred_region
      %73 = dma.done [#allocation6], 2048
    $region37: #{tpu_custom_call.1} parent=1 // pred_fallthru
      _
    // Predicated region
    $region38: #{tpu_custom_call.1} parent=1 // pred_check
      _
    $region39: #{tpu_custom_call.1} parent=1 // pred_check_branch
      %75 = sbr.rel (0) target = $region41
    $region40: #{tpu_custom_call.1} parent=1 // pred_region
      %76 = dma.done [#allocation6], 2048
    $region41: #{tpu_custom_call.1} parent=1 // pred_fallthru
      _
    // Predicated region
    $region42: #{tpu_custom_call.1} parent=1 // pred_check
      _
    $region43: #{tpu_custom_call.1} parent=1 // pred_check_branch
      %78 = sbr.rel (0) target = $region45
    $region44: #{tpu_custom_call.1} parent=1 // pred_region
      %79 = dma.done [#allocation9], 2048
    $region45: #{tpu_custom_call.1} parent=1 // pred_fallthru
      _
    %v80 = vld [vmem:[#allocation2] sm:$0xff]
    %v81 = vld [vmem:[#allocation5] sm:$0xff]
    %v82 = vld [vmem:[#allocation5 + $0x8] sm:$0xff]
    %v83 = vld [vmem:[#allocation5 + $0x10] sm:$0xff]
    %v84 = vld [vmem:[#allocation5 + $0x18] sm:$0xff]
    %v85 = vld [vmem:[#allocation5 + $0x20] sm:$0xff]
    %v86 = vld [vmem:[#allocation5 + $0x28] sm:$0xff]
    %v87 = vld [vmem:[#allocation5 + $0x30] sm:$0xff]
    %v88 = vld [vmem:[#allocation5 + $0x38] sm:$0xff]
    %v89 = vld [vmem:[#allocation5 + $0x40] sm:$0xff]
    %v90 = vld [vmem:[#allocation5 + $0x48] sm:$0xff]
    %v91 = vld [vmem:[#allocation5 + $0x50] sm:$0xff]
    %v92 = vld [vmem:[#allocation5 + $0x58] sm:$0xff]
    %v93 = vld [vmem:[#allocation5 + $0x60] sm:$0xff]
    %v94 = vld [vmem:[#allocation5 + $0x68] sm:$0xff]
    %v95 = vld [vmem:[#allocation5 + $0x70] sm:$0xff]
    %v96 = vld [vmem:[#allocation5 + $0x78] sm:$0xff]
    %v97 = vld [vmem:[%s2] sm:$0x1]
    %v99 = vlaneseq
    %v100 = vshrl.u32 %v99, 7
    %v101 = vsub.s32 0, %v100
    %v102 = vrot.slane %v97, %v101
    %104 = vmatprep.subr.mxu0 0.0
    %105 = vmatpush1.msra.mxu0 %v96
    %106 = vmatprep.subr.mxu0 0.0
    %107 = vmatpush1.msra.mxu0 %v95
    %108 = vmatprep.subr.mxu0 0.0
    %109 = vmatpush1.msra.mxu0 %v94
    %110 = vmatprep.subr.mxu0 0.0
    %111 = vmatpush1.msra.mxu0 %v93
    %112 = vmatprep.subr.mxu0 0.0
    %113 = vmatpush1.msra.mxu0 %v92
    %114 = vmatprep.subr.mxu0 0.0
    %115 = vmatpush1.msra.mxu0 %v91
    %116 = vmatprep.subr.mxu0 0.0
    %117 = vmatpush1.msra.mxu0 %v90
    %118 = vmatprep.subr.mxu0 0.0
    %119 = vmatpush1.msra.mxu0 %v89
    %120 = vmatprep.subr.mxu0 0.0
    %121 = vmatpush1.msra.mxu0 %v88
    %122 = vmatprep.subr.mxu0 0.0
    %123 = vmatpush1.msra.mxu0 %v87
    %124 = vmatprep.subr.mxu0 0.0
    %125 = vmatpush1.msra.mxu0 %v86
    %126 = vmatprep.subr.mxu0 0.0
    %127 = vmatpush1.msra.mxu0 %v85
    %128 = vmatprep.subr.mxu0 0.0
    %129 = vmatpush1.msra.mxu0 %v84
    %130 = vmatprep.subr.mxu0 0.0
    %131 = vmatpush1.msra.mxu0 %v83
    %132 = vmatprep.subr.mxu0 0.0
    %133 = vmatpush1.msra.mxu0 %v82
    %134 = vmatprep.subr.mxu0 0.0
    %135 = vmatpush1.msra.mxu0 %v81
    %136 = vmatprep.subr.mxu0 0.0
    %137 = vmatpush2.msra.mxu0 0.0
    %138 = vmatprep.subr.mxu0 0.0
    %139 = vmatpush2.msra.mxu0 0.0
    %140 = vmatprep.subr.mxu0 0.0
    %141 = vmatpush2.msra.mxu0 0.0
    %142 = vmatprep.subr.mxu0 0.0
    %143 = vmatpush2.msra.mxu0 0.0
    %144 = vmatprep.subr.mxu0 0.0
    %145 = vmatpush2.msra.mxu0 0.0
    %146 = vmatprep.subr.mxu0 0.0
    %147 = vmatpush2.msra.mxu0 0.0
    %148 = vmatprep.subr.mxu0 0.0
    %149 = vmatpush2.msra.mxu0 0.0
    %150 = vmatprep.subr.mxu0 0.0
    %151 = vmatpush2.msra.mxu0 0.0
    %152 = vmatprep.subr.mxu0 0.0
    %153 = vmatpush2.msra.mxu0 0.0
    %154 = vmatprep.subr.mxu0 0.0
    %155 = vmatpush2.msra.mxu0 0.0
    %156 = vmatprep.subr.mxu0 0.0
    %157 = vmatpush2.msra.mxu0 0.0
    %158 = vmatprep.subr.mxu0 0.0
    %159 = vmatpush2.msra.mxu0 0.0
    %160 = vmatprep.subr.mxu0 0.0
    %161 = vmatpush2.msra.mxu0 0.0
    %162 = vmatprep.subr.mxu0 0.0
    %163 = vmatpush2.msra.mxu0 0.0
    %164 = vmatprep.subr.mxu0 0.0
    %165 = vmatpush2.msra.mxu0 0.0
    %166 = vmatprep.subr.mxu0 0.0
    %167 = vmatpush2.msra.mxu0 0.0
    %168 = vmatprep.mubr.f32.mxu0 0.0
    %169 = vmatmul.mubr.f32.gmra.mxu0 %v80
    %v170 = vpop.f32.mrf.mxu0
    %v171 = vadd.f32 %v102, %v170
    %v172 = vpop.f32.mrf.mxu0
    %173 = vdwg.mxu0
    %v174 = vmax.f32 %v171, 0.0
    %v175 = vld [vmem:[#allocation7] sm:$0xff]
    %v176 = vld [vmem:[#allocation7 + $0x8] sm:$0xff]
    %v177 = vld [vmem:[#allocation7 + $0x10] sm:$0xff]
    %v178 = vld [vmem:[#allocation7 + $0x18] sm:$0xff]
    %v179 = vld [vmem:[#allocation7 + $0x20] sm:$0xff]
    %v180 = vld [vmem:[#allocation7 + $0x28] sm:$0xff]
    %v181 = vld [vmem:[#allocation7 + $0x30] sm:$0xff]
    %v182 = vld [vmem:[#allocation7 + $0x38] sm:$0xff]
    %v183 = vld [vmem:[#allocation7 + $0x40] sm:$0xff]
    %v184 = vld [vmem:[#allocation7 + $0x48] sm:$0xff]
    %v185 = vld [vmem:[#allocation7 + $0x50] sm:$0xff]
    %v186 = vld [vmem:[#allocation7 + $0x58] sm:$0xff]
    %v187 = vld [vmem:[#allocation7 + $0x60] sm:$0xff]
    %v188 = vld [vmem:[#allocation7 + $0x68] sm:$0xff]
    %v189 = vld [vmem:[#allocation7 + $0x70] sm:$0xff]
    %v190 = vld [vmem:[#allocation7 + $0x78] sm:$0xff]
    %v191 = vld [vmem:[%s4] sm:$0x1]
    %v193 = vlaneseq
    %v194 = vshrl.u32 %v193, 7
    %v195 = vsub.s32 0, %v194
    %v196 = vrot.slane %v191, %v195
    %198 = vmatprep.subr.mxu0 0.0
    %199 = vmatpush1.msra.mxu0 %v190
    %200 = vmatprep.subr.mxu0 0.0
    %201 = vmatpush1.msra.mxu0 %v189
    %202 = vmatprep.subr.mxu0 0.0
    %203 = vmatpush1.msra.mxu0 %v188
    %204 = vmatprep.subr.mxu0 0.0
    %205 = vmatpush1.msra.mxu0 %v187
    %206 = vmatprep.subr.mxu0 0.0
    %207 = vmatpush1.msra.mxu0 %v186
    %208 = vmatprep.subr.mxu0 0.0
    %209 = vmatpush1.msra.mxu0 %v185
    %210 = vmatprep.subr.mxu0 0.0
    %211 = vmatpush1.msra.mxu0 %v184
    %212 = vmatprep.subr.mxu0 0.0
    %213 = vmatpush1.msra.mxu0 %v183
    %214 = vmatprep.subr.mxu0 0.0
    %215 = vmatpush1.msra.mxu0 %v182
    %216 = vmatprep.subr.mxu0 0.0
    %217 = vmatpush1.msra.mxu0 %v181
    %218 = vmatprep.subr.mxu0 0.0
    %219 = vmatpush1.msra.mxu0 %v180
    %220 = vmatprep.subr.mxu0 0.0
    %221 = vmatpush1.msra.mxu0 %v179
    %222 = vmatprep.subr.mxu0 0.0
    %223 = vmatpush1.msra.mxu0 %v178
    %224 = vmatprep.subr.mxu0 0.0
    %225 = vmatpush1.msra.mxu0 %v177
    %226 = vmatprep.subr.mxu0 0.0
    %227 = vmatpush1.msra.mxu0 %v176
    %228 = vmatprep.subr.mxu0 0.0
    %229 = vmatpush1.msra.mxu0 %v175
    %230 = vmatprep.subr.mxu0 0.0
    %231 = vmatpush2.msra.mxu0 0.0
    %232 = vmatprep.subr.mxu0 0.0
    %233 = vmatpush2.msra.mxu0 0.0
    %234 = vmatprep.subr.mxu0 0.0
    %235 = vmatpush2.msra.mxu0 0.0
    %236 = vmatprep.subr.mxu0 0.0
    %237 = vmatpush2.msra.mxu0 0.0
    %238 = vmatprep.subr.mxu0 0.0
    %239 = vmatpush2.msra.mxu0 0.0
    %240 = vmatprep.subr.mxu0 0.0
    %241 = vmatpush2.msra.mxu0 0.0
    %242 = vmatprep.subr.mxu0 0.0
    %243 = vmatpush2.msra.mxu0 0.0
    %244 = vmatprep.subr.mxu0 0.0
    %245 = vmatpush2.msra.mxu0 0.0
    %246 = vmatprep.subr.mxu0 0.0
    %247 = vmatpush2.msra.mxu0 0.0
    %248 = vmatprep.subr.mxu0 0.0
    %249 = vmatpush2.msra.mxu0 0.0
    %250 = vmatprep.subr.mxu0 0.0
    %251 = vmatpush2.msra.mxu0 0.0
    %252 = vmatprep.subr.mxu0 0.0
    %253 = vmatpush2.msra.mxu0 0.0
    %254 = vmatprep.subr.mxu0 0.0
    %255 = vmatpush2.msra.mxu0 0.0
    %256 = vmatprep.subr.mxu0 0.0
    %257 = vmatpush2.msra.mxu0 0.0
    %258 = vmatprep.subr.mxu0 0.0
    %259 = vmatpush2.msra.mxu0 0.0
    %260 = vmatprep.subr.mxu0 0.0
    %261 = vmatpush2.msra.mxu0 0.0
    %262 = vmatprep.mubr.f32.mxu0 0.0
    %263 = vmatmul.mubr.f32.gmra.mxu0 %v174
    %v264 = vpop.f32.mrf.mxu0
    %v265 = vadd.f32 %v196, %v264
    %v266 = vpop.f32.mrf.mxu0
    %267 = vdwg.mxu0
    %v268 = vmax.f32 %v265, 0.0
    %v269 = vrot.slane %v268, 4
    %v270 = vadd.f32 %v268, %v269
    %v271 = vrot.slane %v270, 2
    %v272 = vadd.f32 %v270, %v271
    %v273 = vrot.slane %v272, 1
    %v274 = vadd.f32 %v272, %v273
    %v275 = vmul.f32 %v274, 0.125
    %v276 = vld [vmem:[#allocation8] sm:$0xff]
    %v277 = vld [vmem:[#allocation8 + $0x8] sm:$0xff]
    %v278 = vld [vmem:[#allocation8 + $0x10] sm:$0xff]
    %v279 = vld [vmem:[#allocation8 + $0x18] sm:$0xff]
    %v280 = vld [vmem:[#allocation8 + $0x20] sm:$0xff]
    %v281 = vld [vmem:[#allocation8 + $0x28] sm:$0xff]
    %v282 = vld [vmem:[#allocation8 + $0x30] sm:$0xff]
    %v283 = vld [vmem:[#allocation8 + $0x38] sm:$0xff]
    %v284 = vld [vmem:[#allocation8 + $0x40] sm:$0xff]
    %v285 = vld [vmem:[#allocation8 + $0x48] sm:$0xff]
    %v286 = vld [vmem:[#allocation8 + $0x50] sm:$0xff]
    %v287 = vld [vmem:[#allocation8 + $0x58] sm:$0xff]
    %v288 = vld [vmem:[#allocation8 + $0x60] sm:$0xff]
    %v289 = vld [vmem:[#allocation8 + $0x68] sm:$0xff]
    %v290 = vld [vmem:[#allocation8 + $0x70] sm:$0xff]
    %v291 = vld [vmem:[#allocation8 + $0x78] sm:$0xff]
    %v292 = vld [vmem:[%s6] sm:$0x1]
    %293 = vmatprep.subr.mxu0 0.0
    %294 = vmatpush1.msra.mxu0 %v291
    %295 = vmatprep.subr.mxu0 0.0
    %296 = vmatpush1.msra.mxu0 %v290
    %297 = vmatprep.subr.mxu0 0.0
    %298 = vmatpush1.msra.mxu0 %v289
    %299 = vmatprep.subr.mxu0 0.0
    %300 = vmatpush1.msra.mxu0 %v288
    %301 = vmatprep.subr.mxu0 0.0
    %302 = vmatpush1.msra.mxu0 %v287
    %303 = vmatprep.subr.mxu0 0.0
    %304 = vmatpush1.msra.mxu0 %v286
    %305 = vmatprep.subr.mxu0 0.0
    %306 = vmatpush1.msra.mxu0 %v285
    %307 = vmatprep.subr.mxu0 0.0
    %308 = vmatpush1.msra.mxu0 %v284
    %309 = vmatprep.subr.mxu0 0.0
    %310 = vmatpush1.msra.mxu0 %v283
    %311 = vmatprep.subr.mxu0 0.0
    %312 = vmatpush1.msra.mxu0 %v282
    %313 = vmatprep.subr.mxu0 0.0
    %314 = vmatpush1.msra.mxu0 %v281
    %315 = vmatprep.subr.mxu0 0.0
    %316 = vmatpush1.msra.mxu0 %v280
    %317 = vmatprep.subr.mxu0 0.0
    %318 = vmatpush1.msra.mxu0 %v279
    %319 = vmatprep.subr.mxu0 0.0
    %320 = vmatpush1.msra.mxu0 %v278
    %321 = vmatprep.subr.mxu0 0.0
    %322 = vmatpush1.msra.mxu0 %v277
    %323 = vmatprep.subr.mxu0 0.0
    %324 = vmatpush1.msra.mxu0 %v276
    %325 = vmatprep.subr.mxu0 0.0
    %326 = vmatpush2.msra.mxu0 0.0
    %327 = vmatprep.subr.mxu0 0.0
    %328 = vmatpush2.msra.mxu0 0.0
    %329 = vmatprep.subr.mxu0 0.0
    %330 = vmatpush2.msra.mxu0 0.0
    %331 = vmatprep.subr.mxu0 0.0
    %332 = vmatpush2.msra.mxu0 0.0
    %333 = vmatprep.subr.mxu0 0.0
    %334 = vmatpush2.msra.mxu0 0.0
    %335 = vmatprep.subr.mxu0 0.0
    %336 = vmatpush2.msra.mxu0 0.0
    %337 = vmatprep.subr.mxu0 0.0
    %338 = vmatpush2.msra.mxu0 0.0
    %339 = vmatprep.subr.mxu0 0.0
    %340 = vmatpush2.msra.mxu0 0.0
    %341 = vmatprep.subr.mxu0 0.0
    %342 = vmatpush2.msra.mxu0 0.0
    %343 = vmatprep.subr.mxu0 0.0
    %344 = vmatpush2.msra.mxu0 0.0
    %345 = vmatprep.subr.mxu0 0.0
    %346 = vmatpush2.msra.mxu0 0.0
    %347 = vmatprep.subr.mxu0 0.0
    %348 = vmatpush2.msra.mxu0 0.0
    %349 = vmatprep.subr.mxu0 0.0
    %350 = vmatpush2.msra.mxu0 0.0
    %351 = vmatprep.subr.mxu0 0.0
    %352 = vmatpush2.msra.mxu0 0.0
    %353 = vmatprep.subr.mxu0 0.0
    %354 = vmatpush2.msra.mxu0 0.0
    %355 = vmatprep.subr.mxu0 0.0
    %356 = vmatpush2.msra.mxu0 0.0
    %357 = vmatprep.mubr.f32.mxu0 0.0
    %358 = vmatmul.mubr.f32.gmra.mxu0 %v275
    %v359 = vpop.f32.mrf.mxu0
    %v360 = vadd.f32 %v292, %v359
    %v361 = vpop.f32.mrf.mxu0
    %362 = vdwg.mxu0
    %363 = vst [vmem:[#allocation10] sm:$0x1] %v360
    // Predicated region
    $region46: #{tpu_custom_call.1} parent=1 // pred_check
      _
    $region47: #{tpu_custom_call.1} parent=1 // pred_check_branch
      %365 = sbr.rel (0) target = $region49
    $region48: #{tpu_custom_call.1} parent=1 // pred_region
      %s367 = ssub.s32 16, 16
      %368 = vsyncadd [#allocation4], %s367
      %s370 = sshll.u32 [#allocation10], 4
      %s371 = int_to_ptr.vmem [resolvable:$true] %s370
      %373 = dma.vmem_to_hbm [thread:$0]  %s371, 16, %s7, [#allocation4]
    $region49: #{tpu_custom_call.1} parent=1 // pred_fallthru
      _
    // Predicated region
    $region50: #{tpu_custom_call.1} parent=1 // pred_check
      _
    $region51: #{tpu_custom_call.1} parent=1 // pred_check_branch
      %375 = sbr.rel (0) target = $region53
    $region52: #{tpu_custom_call.1} parent=1 // pred_region
      %376 = dma.done [#allocation4], 16
    $region53: #{tpu_custom_call.1} parent=1 // pred_fallthru
      _
    %377 = vsyncpa [#allocation3], 1
    %378 = vsyncpa [#allocation6], 1
    %379 = vsyncpa [#allocation9], 1
    %380 = vsyncpa [#allocation4], 1

</llo_original>
